<compile_context>
chip_gen: v7x
topology: tpu7x:2x2x1
jax: 0.10.0
libtpu: 0.0.40
codegen_flags: <defaults>
</compile_context>

<pallas_src>
import functools

import jax
import jax.numpy as jnp
from jax.experimental import pallas as pl
from jax.experimental.pallas import tpu as pltpu


# ----------------------------------------------------------------------------
# Generation-aware VMEM budgeting
# ----------------------------------------------------------------------------
def _vmem_config():
    """Returns (vmem_limit_bytes, pipeline_buffer_budget_bytes)."""
    cap = None
    try:
        cap = pltpu.get_tpu_info().vmem_capacity_bytes
    except Exception:
        cap = None
    if cap is not None and cap >= (100 << 20):
        # v5e / v6e: 128 MiB physical -> push the scoped limit and budget.
        return 64 << 20, 48 << 20
    # v7x (64 MiB physical) or unknown generation: stay conservative.
    return 32 << 20, 22 << 20


def _padded_rows(c, dtype):
    """Sublane-padded row count for a (C, tm) block of the given dtype."""
    itemsize = jnp.dtype(dtype).itemsize
    pack = max(1, 4 // itemsize)          # f32 -> 1, bf16 -> 2, int8 -> 4
    mult = 8 * pack                       # sublane multiple after packing
    return ((c + mult - 1) // mult) * mult


def _pick_tm(m, n, streamed_row_bytes, budget, cap=65536):
    """Largest lane-dense spatial tile whose double-buffered streamed operands
    fit in `budget` bytes.  streamed_row_bytes = per-column bytes of all
    spatially-tiled operands (inputs + output), sublane-padded."""
    per_col_2buf = max(1, 2 * streamed_row_bytes)
    tm = max(128, (budget // per_col_2buf) // 128 * 128)
    tm = min(tm, cap)
    if n == 1 and m > 256:
        # v7x megacore: with a single batch item make sure there are >= 2
        # spatial grid steps so both TensorCores get work.
        half_up = (((m + 1) // 2) + 127) // 128 * 128
        tm = min(tm, max(128, half_up))
    if tm >= m:
        return m          # single full-extent spatial block (always legal)
    return tm             # multiple of 128; ragged last tile via cdiv grid


def _compiler_params(vmem_limit):
    return pltpu.CompilerParams(
        dimension_semantics=("parallel", "parallel"),
        vmem_limit_bytes=int(vmem_limit),
    )


# ----------------------------------------------------------------------------
# Kernels: out(Cout, tm) = W(Cout, Cin) @ X(Cin, tm) + b  [+ residual / +Wf@F]
# ----------------------------------------------------------------------------
def _conv1x1_sum_kernel(w_ref, b_ref, f_ref, r_ref, o_ref):
    acc = jnp.dot(w_ref[...], f_ref[...], preferred_element_type=jnp.float32)
    acc = acc + b_ref[...] + r_ref[...].astype(jnp.float32)
    o_ref[...] = acc.astype(o_ref.dtype)


def _conv1x1_catc_kernel(wx_ref, wf_ref, b_ref, x_ref, f_ref, o_ref):
    acc = jnp.dot(wx_ref[...], x_ref[...], preferred_element_type=jnp.float32)
    acc = acc + jnp.dot(wf_ref[...], f_ref[...],
                        preferred_element_type=jnp.float32)
    o_ref[...] = (acc + b_ref[...]).astype(o_ref.dtype)


# ----------------------------------------------------------------------------
# pallas_call wrappers (inputs already flattened to (N, C, M))
# ----------------------------------------------------------------------------
@functools.partial(jax.jit, static_argnames=("tm", "vmem_limit"))
def _conv1x1_sum_call(w, b, f3, x3, *, tm, vmem_limit):
    n, cf, m = f3.shape
    cout = w.shape[0]
    grid = (n, pl.cdiv(m, tm))
    # TODO(synk): on v5e, if the DMA is still exposed after enlarging tm, add
    # pipeline_mode=pl.Buffered(3) on the (None, c, tm) specs and sweep it.
    # TODO(synk): alias x3 to the output (input_output_aliases) when the
    # residual is dead after this op to save one HBM allocation.
    return pl.pallas_call(
        _conv1x1_sum_kernel,
        out_shape=jax.ShapeDtypeStruct((n, cout, m), f3.dtype),
        grid_spec=pltpu.PrefetchScalarGridSpec(
            num_scalar_prefetch=0,
            grid=grid,
            in_specs=[
                pl.BlockSpec((cout, cf), lambda i, j: (0, 0)),           # W
                pl.BlockSpec((cout, 1), lambda i, j: (0, 0)),            # bias
                pl.BlockSpec((None, cf, tm), lambda i, j: (i, 0, j)),    # feats
                pl.BlockSpec((None, cout, tm), lambda i, j: (i, 0, j)),  # resid
            ],
            out_specs=pl.BlockSpec((None, cout, tm), lambda i, j: (i, 0, j)),
        ),
        compiler_params=_compiler_params(vmem_limit),
    )(w, b, f3, x3)


@functools.partial(jax.jit, static_argnames=("tm", "vmem_limit"))
def _conv1x1_catc_call(wx, wf, b, x3, f3, *, tm, vmem_limit):
    n, cx, m = x3.shape
    cf = f3.shape[1]
    cout = wx.shape[0]
    grid = (n, pl.cdiv(m, tm))
    return pl.pallas_call(
        _conv1x1_catc_kernel,
        out_shape=jax.ShapeDtypeStruct((n, cout, m), x3.dtype),
        grid_spec=pltpu.PrefetchScalarGridSpec(
            num_scalar_prefetch=0,
            grid=grid,
            in_specs=[
                pl.BlockSpec((cout, cx), lambda i, j: (0, 0)),           # W_x
                pl.BlockSpec((cout, cf), lambda i, j: (0, 0)),           # W_f
                pl.BlockSpec((cout, 1), lambda i, j: (0, 0)),            # bias
                pl.BlockSpec((None, cx, tm), lambda i, j: (i, 0, j)),    # x
                pl.BlockSpec((None, cf, tm), lambda i, j: (i, 0, j)),    # feats
            ],
            out_specs=pl.BlockSpec((None, cout, tm), lambda i, j: (i, 0, j)),
        ),
        compiler_params=_compiler_params(vmem_limit),
    )(wx, wf, b, x3, f3)


# ----------------------------------------------------------------------------
# FeaturesConnector wrapper
# ----------------------------------------------------------------------------
class FeaturesConnectorPallas:
    def __init__(self, mode, in_channels, feature_channels, out_channels, key,
                 compute_dtype=None):
        self.mode = mode if feature_channels else ''
        self.in_channels = in_channels
        self.output_channels = (out_channels if self.mode != 'cat'
                                else in_channels + feature_channels)
        # Optional reduced-precision compute path (bf16 halves HBM traffic;
        # accumulation stays f32 in the kernel).  None = keep input dtype.
        self.compute_dtype = compute_dtype
        self.weight = None
        self.bias = None
        if self.mode == 'catc':
            cin = in_channels + feature_channels
        elif self.mode == 'sum':
            cin = feature_channels
        else:
            cin = None
        if cin is not None:
            kw, kb = jax.random.split(key)
            # nn.Conv2d(k=1) default init: U(-1/sqrt(fan_in), 1/sqrt(fan_in))
            bound = 1.0 / (cin ** 0.5)
            # Stored as (Cout, Cin) so the 1x1 conv is W @ X with X = (Cin, M).
            self.weight = jax.random.uniform(
                kw, (out_channels, cin), jnp.float32, -bound, bound)
            self.bias = jax.random.uniform(
                kb, (out_channels, 1), jnp.float32, -bound, bound)

    def _activation_dtype(self, x, features):
        dt = jnp.promote_types(x.dtype, features.dtype)
        if self.compute_dtype is not None:
            dt = jnp.dtype(self.compute_dtype)
        return dt

    def __call__(self, x, features):
        if self.mode == 'cat':
            # Pure concat: memory glue, no hot-path compute.
            return jnp.concatenate((x, features), axis=1)

        vmem_limit, budget = _vmem_config()

        if self.mode == 'catc':
            n, cx, h, w = x.shape
            cf = features.shape[1]
            m = h * w
            cout = self.weight.shape[0]
            dt = self._activation_dtype(x, features)
            itemsize = jnp.dtype(dt).itemsize
            streamed = (_padded_rows(cx, dt) + _padded_rows(cf, dt)
                        + _padded_rows(cout, dt)) * itemsize
            tm = _pick_tm(m, n, streamed, budget)
            # Split the weight instead of materializing the channel concat.
            wx = self.weight[:, :cx].astype(dt)
            wf = self.weight[:, cx:].astype(dt)
            out = _conv1x1_catc_call(
                wx, wf, self.bias,
                x.reshape(n, cx, m).astype(dt),
                features.reshape(n, cf, m).astype(dt),
                tm=tm, vmem_limit=vmem_limit)
            return out.reshape(n, cout, h, w)

        if self.mode == 'sum':
            n, cf, h, w = features.shape
            cout = self.weight.shape[0]
            m = h * w
            dt = self._activation_dtype(x, features)
            itemsize = jnp.dtype(dt).itemsize
            streamed = (_padded_rows(cf, dt)
                        + 2 * _padded_rows(cout, dt)) * itemsize
            tm = _pick_tm(m, n, streamed, budget)
            out = _conv1x1_sum_call(
                self.weight.astype(dt), self.bias,
                features.reshape(n, cf, m).astype(dt),
                x.reshape(n, cout, m).astype(dt),
                tm=tm, vmem_limit=vmem_limit)
            return out.reshape(n, cout, h, w)

        return x


# ----------------------------------------------------------------------------
# Pure-JAX reference (mirrors the PyTorch forward exactly)
# ----------------------------------------------------------------------------
def _reference(mod, x, features):
    def conv1x1(inp, w, b):
        y = jnp.einsum('nchw,dc->ndhw', inp, w)
        return y + b[:, 0][None, :, None, None]

    if mod.mode == 'cat':
        return jnp.concatenate((x, features), axis=1)
    if mod.mode == 'catc':
        return conv1x1(jnp.concatenate((x, features), axis=1),
                       mod.weight, mod.bias)
    if mod.mode == 'sum':
        return conv1x1(features, mod.weight, mod.bias) + x
    return x


if __name__ == "__main__":
    key = jax.random.PRNGKey(0)
    k_x, k_f, k_p1, k_p2 = jax.random.split(key, 4)

    N, C_IN, C_FEAT, C_OUT, H, W = 2, 4, 4, 4, 16, 16
    x = jax.random.normal(k_x, (N, C_IN, H, W), jnp.float32)
    features = jax.random.normal(k_f, (N, C_FEAT, H, W), jnp.float32)

    ok = True

    # mode = 'catc'  (split-weight two-matmul kernel, no concat materialized)
    mod_catc = FeaturesConnectorPallas('catc', C_IN, C_FEAT, C_OUT, k_p1)
    out_catc = jax.block_until_ready(mod_catc(x, features))
    ref_catc = _reference(mod_catc, x, features)
    ok &= bool(jnp.allclose(out_catc, ref_catc, atol=1e-5, rtol=1e-5))
    assert out_catc.shape == (N, C_OUT, H, W)

    # mode = 'sum'  (conv on features + fused residual add of x, all in NCHW)
    mod_sum = FeaturesConnectorPallas('sum', C_IN, C_FEAT, C_OUT, k_p2)
    out_sum = jax.block_until_ready(mod_sum(x, features))
    ref_sum = _reference(mod_sum, x, features)
    ok &= bool(jnp.allclose(out_sum, ref_sum, atol=1e-5, rtol=1e-5))
    assert out_sum.shape == (N, C_OUT, H, W)

    # mode = 'cat'  (pure concat, plain JAX glue)
    mod_cat = FeaturesConnectorPallas('cat', C_IN, C_FEAT, C_OUT, k_p1)
    out_cat = jax.block_until_ready(mod_cat(x, features))
    ok &= bool(jnp.allclose(out_cat, _reference(mod_cat, x, features)))
    assert out_cat.shape == (N, C_IN + C_FEAT, H, W)

    # mode = ''  (identity passthrough when feature_channels == 0)
    mod_id = FeaturesConnectorPallas('sum', C_IN, 0, C_OUT, k_p1)
    out_id = jax.block_until_ready(mod_id(x, features))
    ok &= bool(jnp.allclose(out_id, x))

    # bf16 compute path (halves HBM traffic; f32 accumulation) -- loose check.
    mod_bf16 = FeaturesConnectorPallas('catc', C_IN, C_FEAT, C_OUT, k_p1,
                                       compute_dtype=jnp.bfloat16)
    out_bf16 = jax.block_until_ready(mod_bf16(x, features))
    ok &= bool(jnp.allclose(out_bf16.astype(jnp.float32), ref_catc,
                            atol=5e-2, rtol=5e-2))
    assert out_bf16.shape == (N, C_OUT, H, W)

    if ok:
        print("KERNEL_OK")
    else:
        print("KERNEL_MISMATCH")
</pallas_src>

<mosaic_0001>
module attributes {stable_mosaic.version = 11 : i64} {
  func.func @_conv1x1_catc_kernel(%arg0: i32, %arg1: i32, %arg2: memref<4x4xf32, #tpu.memory_space<vmem>>, %arg3: memref<4x4xf32, #tpu.memory_space<vmem>>, %arg4: memref<4x1xf32, #tpu.memory_space<vmem>>, %arg5: memref<1x4x256xf32, #tpu.memory_space<vmem>>, %arg6: memref<1x4x256xf32, #tpu.memory_space<vmem>>, %arg7: memref<1x4x256xf32, #tpu.memory_space<vmem>>) attributes {dimension_semantics = [#tpu.dimension_semantics<parallel>, #tpu.dimension_semantics<parallel>], iteration_bounds = array<i64: 2, 1>, scalar_prefetch = 0 : i64, scratch_operands = 0 : i64, tpu.core_type = #tpu.core_type<tc>, window_params = [{pipeline_mode = #tpu.pipeline_mode<synchronous>, transform_indices = @transform_0, window_bounds = array<i64: 4, 4>}, {pipeline_mode = #tpu.pipeline_mode<synchronous>, transform_indices = @transform_1, window_bounds = array<i64: 4, 4>}, {pipeline_mode = #tpu.pipeline_mode<synchronous>, transform_indices = @transform_2, window_bounds = array<i64: 4, 1>}, {transform_indices = @transform_3, window_bounds = array<i64: 1, 4, 256>}, {transform_indices = @transform_4, window_bounds = array<i64: 1, 4, 256>}, {transform_indices = @transform_5, window_bounds = array<i64: 1, 4, 256>}]} {
    %c0 = arith.constant 0 : index
    %c0_0 = arith.constant 0 : index
    %0 = vector.load %arg2[%c0, %c0_0] : memref<4x4xf32, #tpu.memory_space<vmem>>, vector<4x4xf32>
    %c0_1 = arith.constant 0 : index
    %c0_2 = arith.constant 0 : index
    %c0_3 = arith.constant 0 : index
    %1 = vector.load %arg5[%c0_1, %c0_2, %c0_3] : memref<1x4x256xf32, #tpu.memory_space<vmem>>, vector<1x4x256xf32>
    %2 = vector.shape_cast %1 : vector<1x4x256xf32> to vector<4x256xf32>
    %cst = arith.constant dense<0.000000e+00> : vector<4x256xf32>
    %3 = tpu.matmul %0, %2, %cst {dimension_numbers = #tpu.dot_dimension_numbers<[1], [0], [0], [1], [0, 0, 1, 1], [], []>} : vector<4x4xf32>, vector<4x256xf32>, vector<4x256xf32> -> vector<4x256xf32>
    %c0_4 = arith.constant 0 : index
    %c0_5 = arith.constant 0 : index
    %4 = vector.load %arg3[%c0_4, %c0_5] : memref<4x4xf32, #tpu.memory_space<vmem>>, vector<4x4xf32>
    %c0_6 = arith.constant 0 : index
    %c0_7 = arith.constant 0 : index
    %c0_8 = arith.constant 0 : index
    %5 = vector.load %arg6[%c0_6, %c0_7, %c0_8] : memref<1x4x256xf32, #tpu.memory_space<vmem>>, vector<1x4x256xf32>
    %6 = vector.shape_cast %5 : vector<1x4x256xf32> to vector<4x256xf32>
    %cst_9 = arith.constant dense<0.000000e+00> : vector<4x256xf32>
    %7 = tpu.matmul %4, %6, %cst_9 {dimension_numbers = #tpu.dot_dimension_numbers<[1], [0], [0], [1], [0, 0, 1, 1], [], []>} : vector<4x4xf32>, vector<4x256xf32>, vector<4x256xf32> -> vector<4x256xf32>
    %8 = arith.addf %3, %7 : vector<4x256xf32>
    %c0_10 = arith.constant 0 : index
    %c0_11 = arith.constant 0 : index
    %9 = vector.load %arg4[%c0_10, %c0_11] : memref<4x1xf32, #tpu.memory_space<vmem>>, vector<4x1xf32>
    %10 = vector.broadcast %9 : vector<4x1xf32> to vector<4x256xf32>
    %11 = arith.addf %8, %10 : vector<4x256xf32>
    %c0_12 = arith.constant 0 : index
    %c0_13 = arith.constant 0 : index
    %c0_14 = arith.constant 0 : index
    %12 = vector.load %arg7[%c0_12, %c0_13, %c0_14] : memref<1x4x256xf32, #tpu.memory_space<vmem>>, vector<1x4x256xf32>
    %13 = vector.shape_cast %12 : vector<1x4x256xf32> to vector<4x256xf32>
    %14 = vector.shape_cast %11 : vector<4x256xf32> to vector<1x4x256xf32>
    tpu.vector_store %arg7[%c0_12, %c0_13, %c0_14], %14 {strides = array<i32>} : memref<1x4x256xf32, #tpu.memory_space<vmem>>, vector<1x4x256xf32>,
    return
  }
  func.func @transform_0(%arg0: i32, %arg1: i32) -> (i32, i32) {
    %c0_i32 = arith.constant 0 : i32
    %c0_i32_0 = arith.constant 0 : i32
    %c0_i32_1 = arith.constant 0 : i32
    return %c0_i32, %c0_i32_0 : i32, i32
  }
  func.func @transform_1(%arg0: i32, %arg1: i32) -> (i32, i32) {
    %c0_i32 = arith.constant 0 : i32
    %c0_i32_0 = arith.constant 0 : i32
    %c0_i32_1 = arith.constant 0 : i32
    return %c0_i32, %c0_i32_0 : i32, i32
  }
  func.func @transform_2(%arg0: i32, %arg1: i32) -> (i32, i32) {
    %c0_i32 = arith.constant 0 : i32
    %c0_i32_0 = arith.constant 0 : i32
    %c0_i32_1 = arith.constant 0 : i32
    return %c0_i32, %c0_i32_0 : i32, i32
  }
  func.func @transform_3(%arg0: i32, %arg1: i32) -> (i32, i32, i32) {
    %c0_i32 = arith.constant 0 : i32
    %c0_i32_0 = arith.constant 0 : i32
    return %arg0, %c0_i32, %arg1 : i32, i32, i32
  }
  func.func @transform_4(%arg0: i32, %arg1: i32) -> (i32, i32, i32) {
    %c0_i32 = arith.constant 0 : i32
    %c0_i32_0 = arith.constant 0 : i32
    return %arg0, %c0_i32, %arg1 : i32, i32, i32
  }
  func.func @transform_5(%arg0: i32, %arg1: i32) -> (i32, i32, i32) {
    %c0_i32 = arith.constant 0 : i32
    %c0_i32_0 = arith.constant 0 : i32
    return %arg0, %c0_i32, %arg1 : i32, i32, i32
  }
}

</mosaic_0001>

<llo_original>
// kernel: _conv1x1_catc_call.1
$region0: #{_conv1x1_catc_call.1}
  #allocation0 [shape = 'u32[]', space=smem, size = 0x4, offset = 0x4, fixed_abs, tag = 'smem constant byte address 0x4 - core index']
  #allocation1 [shape = 'u32[144,128]{1,0:T(1,128)}', space=vmem, size = 0x12000, scoped, tag = 'internal scratch']
  %s0 = inlined_call_operand.hbm [shape: f32[4,4], index: 0, kind: input, shape index: {}]
  %s1 = inlined_call_operand.hbm [shape: f32[4,4], index: 1, kind: input, shape index: {}]
  %s2 = inlined_call_operand.vmem [shape: f32[4,1], index: 2, kind: input, shape index: {}]
  %s3 = inlined_call_operand.vmem [shape: f32[2,4,256], index: 3, kind: input, shape index: {}]
  %s4 = inlined_call_operand.hbm [shape: f32[2,4,256], index: 4, kind: input, shape index: {}]
  %s5 = inlined_call_operand.hbm [shape: f32[2,4,256], index: 5, kind: output, shape index: {}]
  %s6 = sld [smem:[#allocation0]]
  $region65: #{_conv1x1_catc_call.1} parent=0
    _
  %s8 = ssub.s32 1, %s6
  %s9 = scalar_select 0, %s8, %s6
  $region1: #{_conv1x1_catc_call.1} parent=0
    #allocation2 [shape = 'u8[2048]{0}', space=vmem, size = 0x800, scoped, tag = 'input window, operand 0, single buffered']
    #allocation3 [shape = 's32[2]{0}', space=sflag, size = 0x8, scoped, tag = 'scoped memory for _conv1x1_catc_call.1']
    #allocation4 [shape = 's32[2]{0}', space=sflag, size = 0x8, scoped, tag = 'scoped memory for _conv1x1_catc_call.1']
    #allocation5 [shape = 'u8[2048]{0}', space=vmem, size = 0x800, scoped, tag = 'input window, operand 1, single buffered']
    #allocation6 [shape = 's32[1]{0}', space=sflag, size = 0x4, scoped, tag = 'scoped memory for _conv1x1_catc_call.1']
    #allocation7 [shape = 'u8[8192]{0}', space=vmem, size = 0x2000, scoped, tag = 'input window, operand 4']
    #allocation8 [shape = 'u8[8192]{0}', space=vmem, size = 0x2000, scoped, tag = 'output window, operand 0']
    %10 = vsyncpa [#allocation3], 0
    %11 = vsyncpa [#allocation6], 0
    %12 = vsyncpa [#allocation4], 0
    %s13 = scalar_lea.sflag [#allocation4], 1
    %14 = vsyncpa %s13, 0
    loop: start=0, step=1, limit=4
    $region2: #{_conv1x1_catc_call.1} parent=1 // loop_pre_header
      _
    $region3: #{_conv1x1_catc_call.1} parent=1 // loop_header
      %s16 = sphi 0, %s20
      %p17 = scmp.ge.s32.totalorder %s16, 4
      %s23 = sphi 0, %s35
      %s24 = sphi 0, %s31
      %s25 = sphi 0, %s23
      %s26 = sphi 0, %s24
      %s27 = sphi 0, %s25
      %s28 = sphi 0, %s26
      %s36 = sphi 0, %s36
      %s38 = sphi 0, %s36
      %s39 = sphi 0, %s38
      %s53 = sphi 0, %s39
      %s57 = sphi 0, %s57
      %s59 = sphi 0, %s57
      %s60 = sphi 0, %s59
      %s74 = sphi 0, %s60
      %s78 = sphi 0, %s78
      %s80 = sphi 0, %s78
      %s81 = sphi 0, %s80
      %s95 = sphi 0, %s81
      %s103 = sphi 0, %s105
      %s106 = sphi 0, %s103
      %s107 = sphi 0, %s106
      %s123 = sphi 0, %s107
      %s131 = sphi 0, %s133
      %s134 = sphi 0, %s131
      %s135 = sphi 0, %s134
      %s151 = sphi 0, %s135
      %s159 = sphi 0, %s161
      %s162 = sphi 0, %s159
      %s163 = sphi 0, %s162
      %s179 = sphi 0, %s163
    $region4: #{_conv1x1_catc_call.1} parent=1 // loop_header_branch
      %19 = sbr.rel (%p17) target = $region8
    $region5: #{_conv1x1_catc_call.1} parent=1 // loop_body
      %s21 = ssub.s32 %s16, 1
      %s22 = ssub.s32 %s16, 2
      %s29 = sadd.s32 1, %s24
      %p30 = scmp.ge.s32.totalorder %s29, 1
      %s31 = scalar_select %p30, 0, %s29
      %s32 = sadd.s32 1, %s23
      %s33 = scalar_select %p30, %s32, %s23
      %p34 = scmp.ge.s32.totalorder %s33, 2
      %s35 = scalar_select %p34, 0, %s33
      %s37 = sadd.s32 %s36, 1
      %p40 = scmp.eq.s32.totalorder %s16, 1
      %p41 = scmp.ne.s32.totalorder %s36, %s38
      %p42 = scmp.eq.s32.totalorder %s16, 0
      %p43 = por %p41, %p42
      %p44 = scmp.ne.s32.totalorder %s36, %s38
      %p45 = scmp.eq.s32.totalorder %s21, 1
      %p46 = por %p44, %p45
      %p47 = scmp.ne.s32.totalorder %s38, %s39
      %p48 = scmp.eq.s32.totalorder %s21, 0
      %p49 = por %p47, %p48
      %p50 = scmp.ne.s32.totalorder %s38, %s39
      %p51 = scmp.eq.s32.totalorder %s22, 1
      %p52 = por %p50, %p51
      %p54 = scmp.ne.s32.totalorder %s39, %s53
      %p55 = scmp.eq.s32.totalorder %s22, 0
      %p56 = por %p54, %p55
      %s58 = sadd.s32 %s57, 1
      %p61 = scmp.eq.s32.totalorder %s16, 1
      %p62 = scmp.ne.s32.totalorder %s57, %s59
      %p63 = scmp.eq.s32.totalorder %s16, 0
      %p64 = por %p62, %p63
      %p65 = scmp.ne.s32.totalorder %s57, %s59
      %p66 = scmp.eq.s32.totalorder %s21, 1
      %p67 = por %p65, %p66
      %p68 = scmp.ne.s32.totalorder %s59, %s60
      %p69 = scmp.eq.s32.totalorder %s21, 0
      %p70 = por %p68, %p69
      %p71 = scmp.ne.s32.totalorder %s59, %s60
      %p72 = scmp.eq.s32.totalorder %s22, 1
      %p73 = por %p71, %p72
      %p75 = scmp.ne.s32.totalorder %s60, %s74
      %p76 = scmp.eq.s32.totalorder %s22, 0
      %p77 = por %p75, %p76
      %s79 = sadd.s32 %s78, 1
      %p82 = scmp.eq.s32.totalorder %s16, 1
      %p83 = scmp.ne.s32.totalorder %s78, %s80
      %p84 = scmp.eq.s32.totalorder %s16, 0
      %p85 = por %p83, %p84
      %p86 = scmp.ne.s32.totalorder %s78, %s80
      %p87 = scmp.eq.s32.totalorder %s21, 1
      %p88 = por %p86, %p87
      %p89 = scmp.ne.s32.totalorder %s80, %s81
      %p90 = scmp.eq.s32.totalorder %s21, 0
      %p91 = por %p89, %p90
      %p92 = scmp.ne.s32.totalorder %s80, %s81
      %p93 = scmp.eq.s32.totalorder %s22, 1
      %p94 = por %p92, %p93
      %p96 = scmp.ne.s32.totalorder %s81, %s95
      %p97 = scmp.eq.s32.totalorder %s22, 0
      %p98 = por %p96, %p97
      %s99 = ssub.s32 %s23, %s35
      %s100 = ssub.s32 %s24, %s31
      %s101 = sor.u32 %s99, %s100
      %p102 = scmp.eq.s32.totalorder %s101, 0
      %s104 = sadd.s32 %s103, 1
      %s105 = scalar_select %p102, %s103, %s104
      %p108 = pneg %p102
      %p109 = scmp.eq.s32.totalorder %s16, 1
      %p110 = por %p108, %p109
      %p111 = scmp.ne.s32.totalorder %s103, %s106
      %p112 = scmp.eq.s32.totalorder %s16, 0
      %p113 = por %p111, %p112
      %p114 = scmp.ne.s32.totalorder %s103, %s106
      %p115 = scmp.eq.s32.totalorder %s21, 1
      %p116 = por %p114, %p115
      %p117 = scmp.ne.s32.totalorder %s106, %s107
      %p118 = scmp.eq.s32.totalorder %s21, 0
      %p119 = por %p117, %p118
      %p120 = scmp.ne.s32.totalorder %s106, %s107
      %p121 = scmp.eq.s32.totalorder %s22, 1
      %p122 = por %p120, %p121
      %p124 = scmp.ne.s32.totalorder %s107, %s123
      %p125 = scmp.eq.s32.totalorder %s22, 0
      %p126 = por %p124, %p125
      %s127 = ssub.s32 %s23, %s35
      %s128 = ssub.s32 %s24, %s31
      %s129 = sor.u32 %s127, %s128
      %p130 = scmp.eq.s32.totalorder %s129, 0
      %s132 = sadd.s32 %s131, 1
      %s133 = scalar_select %p130, %s131, %s132
      %p136 = pneg %p130
      %p137 = scmp.eq.s32.totalorder %s16, 1
      %p138 = por %p136, %p137
      %p139 = scmp.ne.s32.totalorder %s131, %s134
      %p140 = scmp.eq.s32.totalorder %s16, 0
      %p141 = por %p139, %p140
      %p142 = scmp.ne.s32.totalorder %s131, %s134
      %p143 = scmp.eq.s32.totalorder %s21, 1
      %p144 = por %p142, %p143
      %p145 = scmp.ne.s32.totalorder %s134, %s135
      %p146 = scmp.eq.s32.totalorder %s21, 0
      %p147 = por %p145, %p146
      %p148 = scmp.ne.s32.totalorder %s134, %s135
      %p149 = scmp.eq.s32.totalorder %s22, 1
      %p150 = por %p148, %p149
      %p152 = scmp.ne.s32.totalorder %s135, %s151
      %p153 = scmp.eq.s32.totalorder %s22, 0
      %p154 = por %p152, %p153
      %s155 = ssub.s32 %s23, %s35
      %s156 = ssub.s32 %s24, %s31
      %s157 = sor.u32 %s155, %s156
      %p158 = scmp.eq.s32.totalorder %s157, 0
      %s160 = sadd.s32 %s159, 1
      %s161 = scalar_select %p158, %s159, %s160
      %p164 = pneg %p158
      %p165 = scmp.eq.s32.totalorder %s16, 1
      %p166 = por %p164, %p165
      %p167 = scmp.ne.s32.totalorder %s159, %s162
      %p168 = scmp.eq.s32.totalorder %s16, 0
      %p169 = por %p167, %p168
      %p170 = scmp.ne.s32.totalorder %s159, %s162
      %p171 = scmp.eq.s32.totalorder %s21, 1
      %p172 = por %p170, %p171
      %p173 = scmp.ne.s32.totalorder %s162, %s163
      %p174 = scmp.eq.s32.totalorder %s21, 0
      %p175 = por %p173, %p174
      %p176 = scmp.ne.s32.totalorder %s162, %s163
      %p177 = scmp.eq.s32.totalorder %s22, 1
      %p178 = por %p176, %p177
      %p180 = scmp.ne.s32.totalorder %s163, %s179
      %p181 = scmp.eq.s32.totalorder %s22, 0
      %p182 = por %p180, %p181
      %p183 = scmp.le.s32.totalorder 1, %s16
      %p184 = scmp.lt.s32.totalorder %s16, 3
      %p185 = pnand %p183, %p184
      %p186 = pneg %p185
      // Predicated region
      $region9: #{_conv1x1_catc_call.1} parent=5 // pred_check
        _
      $region10: #{_conv1x1_catc_call.1} parent=5 // pred_check_branch
        %188 = sbr.rel (%p185) target = $region12
      $region11: #{_conv1x1_catc_call.1} parent=5 // pred_region
        %s189 = ssub.s32 %s16, 1
        // Predicated region
        $region13: #{_conv1x1_catc_call.1} parent=11 // pred_check
          %p190 = pneg %p49
        $region14: #{_conv1x1_catc_call.1} parent=11 // pred_check_branch
          %192 = sbr.rel (%p190) target = $region16
        $region15: #{_conv1x1_catc_call.1} parent=11 // pred_region
          %s194 = ssub.s32 64, 64
          %195 = vsyncadd [#allocation3], %s194
          %s197 = sshll.u32 [#allocation2], 4
          %s198 = int_to_ptr.vmem [resolvable:$true] %s197
          %200 = dma.hbm_to_vmem [thread:$0]  %s0, 64, %s198, [#allocation3]
        $region16: #{_conv1x1_catc_call.1} parent=11 // pred_fallthru
          _
        // Predicated region
        $region17: #{_conv1x1_catc_call.1} parent=11 // pred_check
          %p201 = pneg %p70
        $region18: #{_conv1x1_catc_call.1} parent=11 // pred_check_branch
          %203 = sbr.rel (%p201) target = $region20
        $region19: #{_conv1x1_catc_call.1} parent=11 // pred_region
          %s205 = ssub.s32 64, 64
          %206 = vsyncadd [#allocation6], %s205
          %s208 = sshll.u32 [#allocation5], 4
          %s209 = int_to_ptr.vmem [resolvable:$true] %s208
          %211 = dma.hbm_to_vmem [thread:$0]  %s1, 64, %s209, [#allocation6]
        $region20: #{_conv1x1_catc_call.1} parent=11 // pred_fallthru
          _
        // Predicated region
        $region21: #{_conv1x1_catc_call.1} parent=11 // pred_check
          %p212 = pneg %p91
        $region22: #{_conv1x1_catc_call.1} parent=11 // pred_check_branch
          %214 = sbr.rel (%p212) target = $region24
        $region23: #{_conv1x1_catc_call.1} parent=11 // pred_region
          _
        $region24: #{_conv1x1_catc_call.1} parent=11 // pred_fallthru
          _
      $region12: #{_conv1x1_catc_call.1} parent=5 // pred_fallthru
        _
      %p215 = scmp.lt.s32.totalorder %s16, 2
      // Predicated region
      $region25: #{_conv1x1_catc_call.1} parent=5 // pred_check
        %p216 = pneg %p215
      $region26: #{_conv1x1_catc_call.1} parent=5 // pred_check_branch
        %218 = sbr.rel (%p216) target = $region28
      $region27: #{_conv1x1_catc_call.1} parent=5 // pred_region
        // Predicated region
        $region29: #{_conv1x1_catc_call.1} parent=27 // pred_check
          %p219 = pneg %p113
        $region30: #{_conv1x1_catc_call.1} parent=27 // pred_check_branch
          %221 = sbr.rel (%p219) target = $region32
        $region31: #{_conv1x1_catc_call.1} parent=27 // pred_region
          %s222 = smul.u32 2, %s24
          %p223 = scmp.lt.s32.totalorder %s23, 1
          %s224 = scalar_select %p223, %s23, 1
          %p225 = scmp.lt.s32.totalorder %s222, 1
          %s226 = scalar_select %p225, %s222, 1
          %s227 = smul.addr %s224, 2
          %s228 = sadd.s32 %s226, %s227
          %s229 = smul.addr %s228, 4
          %s230 = scalar_lea.vmem %s3, %s229
          %s231 = smul.u32 2, %s24
        $region32: #{_conv1x1_catc_call.1} parent=27 // pred_fallthru
          _
        // Predicated region
        $region33: #{_conv1x1_catc_call.1} parent=27 // pred_check
          %p232 = pneg %p141
        $region34: #{_conv1x1_catc_call.1} parent=27 // pred_check_branch
          %234 = sbr.rel (%p232) target = $region36
        $region35: #{_conv1x1_catc_call.1} parent=27 // pred_region
          %s235 = sand.u32 %s16, 1
          %s236 = scalar_lea.sflag [#allocation3], %s235
          %s237 = sand.u32 %s131, 1
          %s238 = smul.addr %s237, 8
          %s239 = scalar_lea.vmem [#allocation7], %s238
          %s240 = smul.u32 2, %s24
          %s242 = ssub.s32 128, 128
          %243 = vsyncadd %s236, %s242
          %s244 = smul.addr %s23, 2
          %s245 = sadd.s32 %s240, %s244
          %s246 = smul.addr %s245, 64
          %s247 = scalar_lea.hbm %s4, %s246
          %s249 = sshll.u32 %s239, 4
          %s250 = int_to_ptr.vmem [resolvable:$true] %s249
          %252 = dma.hbm_to_vmem [thread:$0]  %s247, 128, %s250, %s236
        $region36: #{_conv1x1_catc_call.1} parent=27 // pred_fallthru
          _
      $region28: #{_conv1x1_catc_call.1} parent=5 // pred_fallthru
        _
      %p253 = scmp.le.s32.totalorder 1, %s16
      %p254 = scmp.lt.s32.totalorder %s16, 3
      %p255 = pnand %p253, %p254
      %p256 = pneg %p255
      // Predicated region
      $region37: #{_conv1x1_catc_call.1} parent=5 // pred_check
        _
      $region38: #{_conv1x1_catc_call.1} parent=5 // pred_check_branch
        %258 = sbr.rel (%p255) target = $region40
      $region39: #{_conv1x1_catc_call.1} parent=5 // pred_region
        %s259 = ssub.s32 %s16, 1
        // Predicated region
        $region41: #{_conv1x1_catc_call.1} parent=39 // pred_check
          %p260 = pneg %p49
        $region42: #{_conv1x1_catc_call.1} parent=39 // pred_check_branch
          %262 = sbr.rel (%p260) target = $region44
        $region43: #{_conv1x1_catc_call.1} parent=39 // pred_region
          %263 = dma.done [#allocation3], 64
        $region44: #{_conv1x1_catc_call.1} parent=39 // pred_fallthru
          _
        // Predicated region
        $region45: #{_conv1x1_catc_call.1} parent=39 // pred_check
          %p264 = pneg %p70
        $region46: #{_conv1x1_catc_call.1} parent=39 // pred_check_branch
          %266 = sbr.rel (%p264) target = $region48
        $region47: #{_conv1x1_catc_call.1} parent=39 // pred_region
          %267 = dma.done [#allocation6], 64
        $region48: #{_conv1x1_catc_call.1} parent=39 // pred_fallthru
          _
        %s268 = sand.u32 %s21, 1
        %s269 = scalar_lea.sflag [#allocation3], %s268
        %s270 = sand.u32 %s134, 1
        %s271 = smul.addr %s270, 8
        %s272 = scalar_lea.vmem [#allocation7], %s271
        // Predicated region
        $region49: #{_conv1x1_catc_call.1} parent=39 // pred_check
          %p273 = pneg %p147
        $region50: #{_conv1x1_catc_call.1} parent=39 // pred_check_branch
          %275 = sbr.rel (%p273) target = $region52
        $region51: #{_conv1x1_catc_call.1} parent=39 // pred_region
          %276 = dma.done %s269, 128
        $region52: #{_conv1x1_catc_call.1} parent=39 // pred_fallthru
          _
        %p277 = pneg %p49
        %p278 = pneg %p46
        %p279 = pneg %p70
        %p280 = pneg %p67
        %p281 = pneg %p91
        %p282 = pneg %p88
        %s283 = smul.u32 2, %s26
        %p284 = scmp.lt.s32.totalorder %s25, 1
        %s285 = scalar_select %p284, %s25, 1
        %p286 = scmp.lt.s32.totalorder %s283, 1
        %s287 = scalar_select %p286, %s283, 1
        %s288 = smul.addr %s285, 2
        %s289 = sadd.s32 %s287, %s288
        %s290 = smul.addr %s289, 4
        %s291 = scalar_lea.vmem %s3, %s290
        %p292 = pneg %p119
        %p293 = pneg %p116
        %s294 = sand.u32 %s21, 1
        %s295 = scalar_lea.sflag [#allocation3], %s294
        %s296 = sand.u32 %s134, 1
        %s297 = smul.addr %s296, 8
        %s298 = scalar_lea.vmem [#allocation7], %s297
        %p299 = pneg %p147
        %p300 = pneg %p144
        %p301 = pneg %p175
        %p302 = pneg %p172
        %s303 = sand.u32 %s162, 1
        %s304 = scalar_lea.sflag [#allocation4], %s303
        %s305 = sand.u32 %s162, 1
        %s306 = smul.addr %s305, 8
        %s307 = scalar_lea.vmem [#allocation8], %s306
        %s308 = smul.u32 2, %s26
        %p309 = scmp.lt.s32.totalorder %s25, 1
        %s310 = scalar_select %p309, %s25, 1
        %p311 = scmp.lt.s32.totalorder %s308, 1
        %s312 = scalar_select %p311, %s308, 1
        %s313 = smul.addr %s310, 2
        %s314 = sadd.s32 %s312, %s313
        %s315 = smul.addr %s314, 4
        %s316 = scalar_lea.vmem %s3, %s315
        %s317 = smul.u32 2, %s26
        %s318 = smul.u32 2, %s26
        %s319 = smul.u32 2, %s26
        %v320 = vld [vmem:[#allocation2] sm:$0xf]
        %v321 = vld [vmem:[%s316] sm:$0xff]
        %v322 = vld [vmem:[#allocation5] sm:$0xf]
        %v323 = vld [vmem:[%s272] sm:$0xff]
        %v325 = vcombine.high %v323, %v323
        %vm326 = vcmask 31744
        %v328 = vsel %vm326, %v322, 0
        %vm330 = vcmask 1043456
        %v331 = vsel %vm330, %v323, 0
        %v333 = vsel %vm330, %v325, 0
        %335 = vmatprep.subr.mxu0 %v333
        %336 = vmatpush1.msra.mxu0 %v331
        %337 = vmatprep.subr.mxu0 0.0
        %338 = vmatpush1.msra.mxu0 0.0
        %339 = vmatprep.subr.mxu0 0.0
        %340 = vmatpush1.msra.mxu0 0.0
        %341 = vmatprep.subr.mxu0 0.0
        %342 = vmatpush1.msra.mxu0 0.0
        %343 = vmatprep.subr.mxu0 0.0
        %344 = vmatpush1.msra.mxu0 0.0
        %345 = vmatprep.subr.mxu0 0.0
        %346 = vmatpush1.msra.mxu0 0.0
        %347 = vmatprep.subr.mxu0 0.0
        %348 = vmatpush1.msra.mxu0 0.0
        %349 = vmatprep.subr.mxu0 0.0
        %350 = vmatpush1.msra.mxu0 0.0
        %351 = vmatprep.subr.mxu0 0.0
        %352 = vmatpush1.msra.mxu0 0.0
        %353 = vmatprep.subr.mxu0 0.0
        %354 = vmatpush1.msra.mxu0 0.0
        %355 = vmatprep.subr.mxu0 0.0
        %356 = vmatpush1.msra.mxu0 0.0
        %357 = vmatprep.subr.mxu0 0.0
        %358 = vmatpush1.msra.mxu0 0.0
        %359 = vmatprep.subr.mxu0 0.0
        %360 = vmatpush1.msra.mxu0 0.0
        %361 = vmatprep.subr.mxu0 0.0
        %362 = vmatpush1.msra.mxu0 0.0
        %363 = vmatprep.subr.mxu0 0.0
        %364 = vmatpush1.msra.mxu0 0.0
        %365 = vmatprep.subr.mxu0 0.0
        %366 = vmatpush1.msra.mxu0 0.0
        %367 = vmatprep.subr.mxu0 0.0
        %368 = vmatpush1.msra.mxu0 0.0
        %369 = vmatprep.subr.mxu0 0.0
        %370 = vmatpush1.msra.mxu0 0.0
        %371 = vmatprep.subr.mxu0 0.0
        %372 = vmatpush1.msra.mxu0 0.0
        %373 = vmatprep.subr.mxu0 0.0
        %374 = vmatpush1.msra.mxu0 0.0
        %375 = vmatprep.subr.mxu0 0.0
        %376 = vmatpush1.msra.mxu0 0.0
        %377 = vmatprep.subr.mxu0 0.0
        %378 = vmatpush1.msra.mxu0 0.0
        %379 = vmatprep.subr.mxu0 0.0
        %380 = vmatpush1.msra.mxu0 0.0
        %381 = vmatprep.subr.mxu0 0.0
        %382 = vmatpush1.msra.mxu0 0.0
        %383 = vmatprep.subr.mxu0 0.0
        %384 = vmatpush1.msra.mxu0 0.0
        %385 = vmatprep.subr.mxu0 0.0
        %386 = vmatpush1.msra.mxu0 0.0
        %387 = vmatprep.subr.mxu0 0.0
        %388 = vmatpush1.msra.mxu0 0.0
        %389 = vmatprep.subr.mxu0 0.0
        %390 = vmatpush1.msra.mxu0 0.0
        %391 = vmatprep.subr.mxu0 0.0
        %392 = vmatpush1.msra.mxu0 0.0
        %393 = vmatprep.subr.mxu0 0.0
        %394 = vmatpush1.msra.mxu0 0.0
        %395 = vmatprep.subr.mxu0 0.0
        %396 = vmatpush1.msra.mxu0 0.0
        %397 = vmatprep.subr.mxu0 0.0
        %398 = vmatpush1.msra.mxu0 0.0
        %399 = vmatprep.mubr.f32.mxu0 0.0
        %400 = vmatmul.mubr.f32.gmra.mrb[0].mxu0 %v328
        %v401 = vpop.f32.mrb[0].mxu0
        %v402 = vadd.f32 0.0, %v401
        %v403 = vpop.f32.mrb[0].mxu0
        %v404 = vadd.f32 0.0, %v403
        %405 = vdwg.mxu0
        %v407 = vcombine.high %v321, %v321
        %v409 = vsel %vm326, %v320, 0
        %v411 = vsel %vm330, %v321, 0
        %v413 = vsel %vm330, %v407, 0
        %415 = vmatprep.subr.mxu0 %v413
        %416 = vmatpush1.msra.mxu0 %v411
        %417 = vmatprep.subr.mxu0 0.0
        %418 = vmatpush1.msra.mxu0 0.0
        %419 = vmatprep.subr.mxu0 0.0
        %420 = vmatpush1.msra.mxu0 0.0
        %421 = vmatprep.subr.mxu0 0.0
        %422 = vmatpush1.msra.mxu0 0.0
        %423 = vmatprep.subr.mxu0 0.0
        %424 = vmatpush1.msra.mxu0 0.0
        %425 = vmatprep.subr.mxu0 0.0
        %426 = vmatpush1.msra.mxu0 0.0
        %427 = vmatprep.subr.mxu0 0.0
        %428 = vmatpush1.msra.mxu0 0.0
        %429 = vmatprep.subr.mxu0 0.0
        %430 = vmatpush1.msra.mxu0 0.0
        %431 = vmatprep.subr.mxu0 0.0
        %432 = vmatpush1.msra.mxu0 0.0
        %433 = vmatprep.subr.mxu0 0.0
        %434 = vmatpush1.msra.mxu0 0.0
        %435 = vmatprep.subr.mxu0 0.0
        %436 = vmatpush1.msra.mxu0 0.0
        %437 = vmatprep.subr.mxu0 0.0
        %438 = vmatpush1.msra.mxu0 0.0
        %439 = vmatprep.subr.mxu0 0.0
        %440 = vmatpush1.msra.mxu0 0.0
        %441 = vmatprep.subr.mxu0 0.0
        %442 = vmatpush1.msra.mxu0 0.0
        %443 = vmatprep.subr.mxu0 0.0
        %444 = vmatpush1.msra.mxu0 0.0
        %445 = vmatprep.subr.mxu0 0.0
        %446 = vmatpush1.msra.mxu0 0.0
        %447 = vmatprep.subr.mxu0 0.0
        %448 = vmatpush1.msra.mxu0 0.0
        %449 = vmatprep.subr.mxu0 0.0
        %450 = vmatpush1.msra.mxu0 0.0
        %451 = vmatprep.subr.mxu0 0.0
        %452 = vmatpush1.msra.mxu0 0.0
        %453 = vmatprep.subr.mxu0 0.0
        %454 = vmatpush1.msra.mxu0 0.0
        %455 = vmatprep.subr.mxu0 0.0
        %456 = vmatpush1.msra.mxu0 0.0
        %457 = vmatprep.subr.mxu0 0.0
        %458 = vmatpush1.msra.mxu0 0.0
        %459 = vmatprep.subr.mxu0 0.0
        %460 = vmatpush1.msra.mxu0 0.0
        %461 = vmatprep.subr.mxu0 0.0
        %462 = vmatpush1.msra.mxu0 0.0
        %463 = vmatprep.subr.mxu0 0.0
        %464 = vmatpush1.msra.mxu0 0.0
        %465 = vmatprep.subr.mxu0 0.0
        %466 = vmatpush1.msra.mxu0 0.0
        %467 = vmatprep.subr.mxu0 0.0
        %468 = vmatpush1.msra.mxu0 0.0
        %469 = vmatprep.subr.mxu0 0.0
        %470 = vmatpush1.msra.mxu0 0.0
        %471 = vmatprep.subr.mxu0 0.0
        %472 = vmatpush1.msra.mxu0 0.0
        %473 = vmatprep.subr.mxu0 0.0
        %474 = vmatpush1.msra.mxu0 0.0
        %475 = vmatprep.subr.mxu0 0.0
        %476 = vmatpush1.msra.mxu0 0.0
        %477 = vmatprep.subr.mxu0 0.0
        %478 = vmatpush1.msra.mxu0 0.0
        %479 = vmatprep.mubr.f32.mxu0 0.0
        %480 = vmatmul.mubr.f32.gmra.mrb[0].mxu0 %v409
        %v481 = vpop.f32.mrb[0].mxu0
        %v482 = vadd.f32 %v402, %v481
        %v483 = vpop.f32.mrb[0].mxu0
        %v484 = vadd.f32 %v404, %v483
        %485 = vdwg.mxu0
        %v486 = vld [vmem:[%s2] sm:$0xf]
        %488 = vset.pattern.permute.xlu0 0
        %489 = vperm.xlu0 %488, %v486
        %v490 = vpop.permute.xlu0 %489
        %v492 = vadd.f32 %v482, %v490
        %v493 = vadd.f32 %v484, %v490
        %v496 = vcombine.low %v492, %v493
        %498 = vst [vmem:[%s307] sm:$0xff] %v496
        %s499 = sand.u32 %s162, 1
        %s500 = scalar_lea.sflag [#allocation4], %s499
        %s501 = sand.u32 %s162, 1
        %s502 = smul.addr %s501, 8
        %s503 = scalar_lea.vmem [#allocation8], %s502
        // Predicated region
        $region53: #{_conv1x1_catc_call.1} parent=39 // pred_check
          %p504 = pneg %p172
        $region54: #{_conv1x1_catc_call.1} parent=39 // pred_check_branch
          %506 = sbr.rel (%p504) target = $region56
        $region55: #{_conv1x1_catc_call.1} parent=39 // pred_region
          %s507 = smul.u32 2, %s26
          %s509 = ssub.s32 128, 128
          %510 = vsyncadd %s500, %s509
          %s511 = smul.addr %s25, 2
          %s512 = sadd.s32 %s507, %s511
          %s513 = smul.addr %s512, 64
          %s514 = scalar_lea.hbm %s5, %s513
          %s516 = sshll.u32 %s503, 4
          %s517 = int_to_ptr.vmem [resolvable:$true] %s516
          %519 = dma.vmem_to_hbm [thread:$0]  %s517, 128, %s514, %s500
        $region56: #{_conv1x1_catc_call.1} parent=39 // pred_fallthru
          _
      $region40: #{_conv1x1_catc_call.1} parent=5 // pred_fallthru
        _
      %p520 = scmp.le.s32.totalorder 2, %s16
      // Predicated region
      $region57: #{_conv1x1_catc_call.1} parent=5 // pred_check
        %p521 = pneg %p520
      $region58: #{_conv1x1_catc_call.1} parent=5 // pred_check_branch
        %523 = sbr.rel (%p521) target = $region60
      $region59: #{_conv1x1_catc_call.1} parent=5 // pred_region
        %s524 = ssub.s32 %s16, 2
        // Predicated region
        $region61: #{_conv1x1_catc_call.1} parent=59 // pred_check
          %p525 = pneg %p178
        $region62: #{_conv1x1_catc_call.1} parent=59 // pred_check_branch
          %527 = sbr.rel (%p525) target = $region64
        $region63: #{_conv1x1_catc_call.1} parent=59 // pred_region
          %s528 = sand.u32 %s163, 1
          %s529 = scalar_lea.sflag [#allocation4], %s528
          %s530 = sand.u32 %s163, 1
          %s531 = smul.addr %s530, 8
          %s532 = scalar_lea.vmem [#allocation8], %s531
          %533 = dma.done %s529, 128
        $region64: #{_conv1x1_catc_call.1} parent=59 // pred_fallthru
          _
      $region60: #{_conv1x1_catc_call.1} parent=5 // pred_fallthru
        _
    $region6: #{_conv1x1_catc_call.1} parent=1 // loop_footer
      %s20 = sadd.s32 1, %s16
    $region7: #{_conv1x1_catc_call.1} parent=1 // loop_footer_branch
      %15 = sbr.rel target = $region3
    $region8: #{_conv1x1_catc_call.1} parent=1 // loop_exit
      _
    %534 = vsyncpa [#allocation3], 1
    %s535 = scalar_lea.sflag [#allocation3], 1
    %536 = vsyncpa %s535, 1
    %537 = vsyncpa [#allocation6], 1
    %538 = vsyncpa [#allocation4], 1
    %s539 = scalar_lea.sflag [#allocation4], 1
    %540 = vsyncpa %s539, 1

</llo_original>
